<compile_context>
chip_gen: v7x
topology: tpu7x:2x2x1
jax: 0.10.0
libtpu: 0.0.40
codegen_flags: <defaults>
</compile_context>

<pallas_src>
import functools

import jax
import jax.numpy as jnp
from jax.experimental import pallas as pl
from jax.experimental.pallas import tpu as pltpu


def _round_up(n, m):
    return ((n + m - 1) // m) * m


# --------------------------------------------------------------------------- #
# Kernel: whole forward for one batch tile.
# --------------------------------------------------------------------------- #
def _disc_kernel(x_ref, w1_ref, b1_ref, wf_ref, bf_ref, w4_ref, b4_ref,
                 w5_ref, b5_ref, out_ref, *, precision):
    f32 = jnp.float32
    cdt = w1_ref.dtype            # MXU operand dtype (bf16 or f32)

    # conv1 (temporal stencil folded into a dense matrix) + bias + ReLU
    h1 = jnp.dot(x_ref[...], w1_ref[...], precision=precision,
                 preferred_element_type=f32)
    h1 = jnp.maximum(h1 + b1_ref[...], 0.0)          # (TB, n_out*n_filter)

    # temp_conv2 fused with the first classifier Linear (exact fusion)
    z1 = jnp.dot(h1.astype(cdt), wf_ref[...], precision=precision,
                 preferred_element_type=f32)
    z1 = jnp.maximum(z1 + bf_ref[...], 0.0)          # (TB, hidden)

    # Linear -> ReLU
    z2 = jnp.dot(z1.astype(cdt), w4_ref[...], precision=precision,
                 preferred_element_type=f32)
    z2 = jnp.maximum(z2 + b4_ref[...], 0.0)          # (TB, hidden)

    # Final N=1 Linear as an NT dot: (8, H) x (TB, H) contracting H -> (8, TB).
    # Row 0 of w5_ref holds the real weights (rows 1..7 are zero padding), so
    # the logits come out lane-major and the output store is a full-width,
    # unmasked vector store (lane-dense out_spec).
    logits = jax.lax.dot_general(
        w5_ref[...], z2.astype(cdt),
        dimension_numbers=(((1,), (1,)), ((), ())),
        precision=precision, preferred_element_type=f32) + b5_ref[...]
    out_ref[...] = jax.nn.sigmoid(logits)            # (8, TB); row 0 is real


# --------------------------------------------------------------------------- #
# One-time host-side weight refactoring (exact algebra + dtype casts).
# --------------------------------------------------------------------------- #
def fold_params(params, seq_len, *, temp_window=10, temp_stride=5,
                matmul_dtype=jnp.bfloat16):
    """Fold the module's weights ONCE; pass the result to the forward wrapper.

    Keeping this off the per-call path removes the stencil scatter, the twjh
    einsum and the dtype casts from every forward (they otherwise cost HBM
    traffic / launch latency comparable to the kernel itself for small B).
    """
    (w1, b1, w2, b2, w3, b3, w4, b4, w5, b5) = params
    n_filter, n_kps, tw = w1.shape
    assert tw == temp_window, (tw, temp_window)
    n_out = (seq_len - temp_window) // temp_stride + 1
    kw = w2.shape[2]                      # conv2 kernel width (3 in the module)
    w2_out = n_filter - kw + 1
    hidden = w3.shape[1]
    hp = jax.lax.Precision.HIGHEST
    assert w2.shape == (n_filter, n_out, kw), w2.shape
    assert w3.shape[0] == n_filter * w2_out, (w3.shape, n_filter, w2_out)

    # ---- conv1 as a single dense matrix over (k, s) -> (t, f) ----------------
    # W1x[(k, s), (t, f)] = w1[f, k, s - t*stride] if 0 <= s - t*stride < window
    w1_kwf = jnp.transpose(w1, (1, 2, 0)).astype(jnp.float32)   # (k, w, f)
    W1x = jnp.zeros((n_kps, seq_len, n_out, n_filter), jnp.float32)
    for t in range(n_out):
        s0 = t * temp_stride
        W1x = W1x.at[:, s0:s0 + temp_window, t, :].set(w1_kwf)
    W1x = W1x.reshape(n_kps * seq_len, n_out * n_filter)
    b1t = jnp.tile(b1, n_out).reshape(1, n_out * n_filter)      # (t, f) order

    # ---- conv2 fused with the first Linear (exact: no ReLU between them) ----
    # V[(t,c),h] = sum_{w: 0<=c-w<w2_out} sum_{f2} w2[f2,t,w]*w3[f2*w2_out+(c-w),h]
    w3r = w3.reshape(n_filter, w2_out, hidden)                  # [f2, j, h]
    A = jnp.einsum('ftw,fjh->twjh', w2, w3r, precision=hp)      # [t, w, j, h]
    V = jnp.zeros((n_out, n_filter, hidden), jnp.float32)
    for w in range(kw):
        V = V.at[:, w:w + w2_out, :].add(A[:, w, :, :])
    V = V.reshape(n_out * n_filter, hidden)
    b_fused = (b3 + jnp.einsum('f,fjh->h', b2, w3r,
                               precision=hp)).reshape(1, hidden)

    # ---- final N=1 Linear as an 8-row block (row 0 real, rows 1..7 zero) ----
    w5_rows = jnp.zeros((8, hidden), jnp.float32).at[0].set(w5[:, 0])
    b5_rows = jnp.zeros((8, 1), jnp.float32).at[0, 0].set(b5[0])

    md = jnp.dtype(matmul_dtype)
    return (W1x.astype(md), b1t.astype(jnp.float32),
            V.astype(md), b_fused.astype(jnp.float32),
            w4.astype(md), b4.reshape(1, hidden).astype(jnp.float32),
            w5_rows.astype(md), b5_rows.astype(jnp.float32))


# --------------------------------------------------------------------------- #
# Batch tiling + pallas_call wrapper.
# --------------------------------------------------------------------------- #
def _pick_batch_tile(B, block_b):
    """Choose (TB, Bp).

    Big tiles amortize the ~0.35us per-grid-step overhead and keep the input
    DMA large; multi-step tiles are 128-aligned so the (8, TB) output blocks
    stay lane-dense, and we target >= 2 steps so both v7x TensorCores get work.
    """
    B8 = _round_up(B, 8)
    if B8 <= 128:
        return B8, B8                         # single step, block == full array
    block_b = max(128, _round_up(block_b, 128))
    TB = min(block_b, _round_up(pl.cdiv(B8, 2), 128))
    Bp = _round_up(B, TB)
    return TB, Bp


def sequence_disc_conv_forward(x, folded, *, block_b=512, precision=None):
    """Forward pass. `folded` comes from fold_params (computed once).

    `precision` is forwarded to the in-kernel dots; pass
    jax.lax.Precision.HIGHEST with an f32-folded weight set if strict f32
    parity is required (default precision already passes 1e-3 at these sizes).
    """
    (W1x, b1t, V, b_fused, w4, b4r, w5r, b5r) = folded
    B, n_kps, seq_len = x.shape
    K = n_kps * seq_len
    assert W1x.shape[0] == K, (W1x.shape, K)
    matmul_dtype = W1x.dtype

    TB, Bp = _pick_batch_tile(B, block_b)
    x_flat = x.reshape(B, K)
    if Bp != B:
        x_flat = jnp.pad(x_flat, ((0, Bp - B), (0, 0)))
    x_flat = x_flat.astype(matmul_dtype)      # bf16 halves the per-row x DMA
    grid = (Bp // TB,)

    kernel = functools.partial(_disc_kernel, precision=precision)
    weights = (W1x, b1t, V, b_fused, w4, b4r, w5r, b5r)

    def _resident(arr):
        # Constant block index => weight stays VMEM-resident across grid steps.
        # (Single-buffering them via pipeline_mode is a further ~100 KiB VMEM
        #  micro-win; skipped to keep the proven lowering path.)
        return pl.BlockSpec(arr.shape, lambda i: (0, 0))

    in_specs = [pl.BlockSpec((TB, K), lambda i: (i, 0))]
    in_specs += [_resident(w) for w in weights]

    out = pl.pallas_call(
        kernel,
        out_shape=jax.ShapeDtypeStruct((8, Bp), jnp.float32),
        grid=grid,
        in_specs=in_specs,
        # Lane-dense output block: full-width unmasked stores, one (8, TB)
        # HBM block per grid step instead of TB 1-lane masked stores.
        out_specs=pl.BlockSpec((8, TB), lambda i: (0, i)),
        compiler_params=pltpu.CompilerParams(
            dimension_semantics=("parallel",)),
    )(x_flat, *weights)
    # Row 0 carries the real logits; rows 1..7 are padding from the 8-row w5.
    return out[0, :B].reshape(B, 1)


# --------------------------------------------------------------------------- #
# Parameter init (matches the module's shapes) and a pure-JAX reference.
# --------------------------------------------------------------------------- #
def init_params(key, n_kps, seq_len, temp_window=10, temp_stride=5,
                n_filter=16, dim_hidden_class=128):
    n_out = (seq_len - temp_window) // temp_stride + 1
    w2_out = n_filter - 3 + 1
    feat = n_filter * w2_out

    def xavier(k, shape, fan_in, fan_out):
        lim = (6.0 / (fan_in + fan_out)) ** 0.5
        return jax.random.uniform(k, shape, jnp.float32, -lim, lim)

    ks = jax.random.split(key, 10)
    w1 = xavier(ks[0], (n_filter, n_kps, temp_window), n_kps * temp_window, n_filter)
    b1 = 0.01 * jax.random.normal(ks[1], (n_filter,), jnp.float32)
    w2 = xavier(ks[2], (n_filter, n_out, 3), n_out * 3, n_filter)
    b2 = 0.01 * jax.random.normal(ks[3], (n_filter,), jnp.float32)
    w3 = xavier(ks[4], (feat, dim_hidden_class), feat, dim_hidden_class)
    b3 = 0.01 * jax.random.normal(ks[5], (dim_hidden_class,), jnp.float32)
    w4 = xavier(ks[6], (dim_hidden_class, dim_hidden_class),
                dim_hidden_class, dim_hidden_class)
    b4 = 0.01 * jax.random.normal(ks[7], (dim_hidden_class,), jnp.float32)
    w5 = xavier(ks[8], (dim_hidden_class, 1), dim_hidden_class, 1)
    b5 = 0.01 * jax.random.normal(ks[9], (1,), jnp.float32)
    return (w1, b1, w2, b2, w3, b3, w4, b4, w5, b5)


def reference_forward(x, params, *, temp_window=10, temp_stride=5):
    """Plain-JAX mirror of the PyTorch forward (for validation)."""
    (w1, b1, w2, b2, w3, b3, w4, b4, w5, b5) = params
    B, n_kps, seq_len = x.shape
    n_filter = w1.shape[0]
    n_out = (seq_len - temp_window) // temp_stride + 1
    w2_out = n_filter - 3 + 1
    hp = jax.lax.Precision.HIGHEST

    patches1 = jnp.stack(
        [x[:, :, t * temp_stride:t * temp_stride + temp_window]
         for t in range(n_out)], axis=1)                      # (B, n_out, n_kps, tw)
    out1 = jnp.einsum('btkw,fkw->bft', patches1, w1, precision=hp) + b1[None, :, None]
    r1 = jnp.maximum(out1, 0.0)                               # (B, n_filter, n_out)

    patches2 = jnp.stack([r1[:, j:j + 3, :] for j in range(w2_out)], axis=1)
    out2 = jnp.einsum('bjwt,ftw->bfj', patches2, w2, precision=hp) + b2[None, :, None]
    flat = out2.reshape(B, n_filter * w2_out)

    z1 = jnp.maximum(jnp.dot(flat, w3, precision=hp) + b3, 0.0)
    z2 = jnp.maximum(jnp.dot(z1, w4, precision=hp) + b4, 0.0)
    return jax.nn.sigmoid(jnp.dot(z2, w5, precision=hp) + b5)


if __name__ == "__main__":
    # small shapes: batch=2, n_kps=8, seq_len=20 (temp_window=10, temp_stride=5)
    B, n_kps, seq_len = 2, 8, 20
    key = jax.random.PRNGKey(0)
    kx, kp, kx2 = jax.random.split(key, 3)
    x = jax.random.normal(kx, (B, n_kps, seq_len), jnp.float32)
    params = init_params(kp, n_kps, seq_len)
    ref = reference_forward(x, params)

    # Default perf path: bf16 MXU operands (all generations), f32 accumulation.
    folded_bf16 = fold_params(params, seq_len)          # fold ONCE, reuse per call
    out = jax.block_until_ready(sequence_disc_conv_forward(x, folded_bf16))
    assert out.shape == (B, 1), out.shape
    assert float(jnp.max(jnp.abs(out - ref))) < 3e-2, (out, ref)

    # f32 MXU-operand path: tight parity with the f32 reference.
    folded_f32 = fold_params(params, seq_len, matmul_dtype=jnp.float32)
    out32 = jax.block_until_ready(sequence_disc_conv_forward(x, folded_f32))
    assert out32.shape == (B, 1), out32.shape
    assert float(jnp.max(jnp.abs(out32 - ref))) < 1e-3, (out32, ref)

    # Multi-step grid path (exercises 128-aligned batch tiles, padding and the
    # two-TensorCore "parallel" split) with the exact f32 weights.
    B2 = 300
    x2 = jax.random.normal(kx2, (B2, n_kps, seq_len), jnp.float32)
    ref2 = reference_forward(x2, params)
    out2 = jax.block_until_ready(
        sequence_disc_conv_forward(x2, folded_f32, block_b=128))
    assert out2.shape == (B2, 1), out2.shape
    assert float(jnp.max(jnp.abs(out2 - ref2))) < 1e-3, (out2, ref2)

    print("KERNEL_OK")
</pallas_src>

<mosaic_0001>
module attributes {stable_mosaic.version = 11 : i64} {
  func.func @_disc_kernel(%arg0: i32, %arg1: memref<8x160xbf16, #tpu.memory_space<vmem>>, %arg2: memref<160x48xbf16, #tpu.memory_space<vmem>>, %arg3: memref<1x48xf32, #tpu.memory_space<vmem>>, %arg4: memref<48x128xbf16, #tpu.memory_space<vmem>>, %arg5: memref<1x128xf32, #tpu.memory_space<vmem>>, %arg6: memref<128x128xbf16, #tpu.memory_space<vmem>>, %arg7: memref<1x128xf32, #tpu.memory_space<vmem>>, %arg8: memref<8x128xbf16, #tpu.memory_space<vmem>>, %arg9: memref<8x1xf32, #tpu.memory_space<vmem>>, %arg10: memref<8x8xf32, #tpu.memory_space<vmem>>) attributes {dimension_semantics = [#tpu.dimension_semantics<parallel>], iteration_bounds = array<i64: 1>, scalar_prefetch = 0 : i64, scratch_operands = 0 : i64, tpu.core_type = #tpu.core_type<tc>, window_params = [{transform_indices = @transform_0, window_bounds = array<i64: 8, 160>}, {pipeline_mode = #tpu.pipeline_mode<synchronous>, transform_indices = @transform_1, window_bounds = array<i64: 160, 48>}, {pipeline_mode = #tpu.pipeline_mode<synchronous>, transform_indices = @transform_2, window_bounds = array<i64: 1, 48>}, {pipeline_mode = #tpu.pipeline_mode<synchronous>, transform_indices = @transform_3, window_bounds = array<i64: 48, 128>}, {pipeline_mode = #tpu.pipeline_mode<synchronous>, transform_indices = @transform_4, window_bounds = array<i64: 1, 128>}, {pipeline_mode = #tpu.pipeline_mode<synchronous>, transform_indices = @transform_5, window_bounds = array<i64: 128, 128>}, {pipeline_mode = #tpu.pipeline_mode<synchronous>, transform_indices = @transform_6, window_bounds = array<i64: 1, 128>}, {pipeline_mode = #tpu.pipeline_mode<synchronous>, transform_indices = @transform_7, window_bounds = array<i64: 8, 128>}, {pipeline_mode = #tpu.pipeline_mode<synchronous>, transform_indices = @transform_8, window_bounds = array<i64: 8, 1>}, {transform_indices = @transform_9, window_bounds = array<i64: 8, 8>}]} {
    %c0 = arith.constant 0 : index
    %c0_0 = arith.constant 0 : index
    %0 = vector.load %arg1[%c0, %c0_0] : memref<8x160xbf16, #tpu.memory_space<vmem>>, vector<8x160xbf16>
    %c0_1 = arith.constant 0 : index
    %c0_2 = arith.constant 0 : index
    %1 = vector.load %arg2[%c0_1, %c0_2] : memref<160x48xbf16, #tpu.memory_space<vmem>>, vector<160x48xbf16>
    %cst = arith.constant dense<0.000000e+00> : vector<8x48xf32>
    %2 = tpu.matmul %0, %1, %cst {dimension_numbers = #tpu.dot_dimension_numbers<[1], [0], [0], [1], [0, 0, 1, 1], [], []>} : vector<8x160xbf16>, vector<160x48xbf16>, vector<8x48xf32> -> vector<8x48xf32>
    %c0_3 = arith.constant 0 : index
    %c0_4 = arith.constant 0 : index
    %3 = vector.load %arg3[%c0_3, %c0_4] : memref<1x48xf32, #tpu.memory_space<vmem>>, vector<1x48xf32>
    %4 = vector.broadcast %3 : vector<1x48xf32> to vector<8x48xf32>
    %5 = arith.addf %2, %4 : vector<8x48xf32>
    %cst_5 = arith.constant 0.000000e+00 : f32
    %6 = vector.broadcast %cst_5 : f32 to vector<8x48xf32>
    %7 = arith.maximumf %5, %6 : vector<8x48xf32>
    %8 = arith.truncf %7 : vector<8x48xf32> to vector<8x48xbf16>
    %c0_6 = arith.constant 0 : index
    %c0_7 = arith.constant 0 : index
    %9 = vector.load %arg4[%c0_6, %c0_7] : memref<48x128xbf16, #tpu.memory_space<vmem>>, vector<48x128xbf16>
    %cst_8 = arith.constant dense<0.000000e+00> : vector<8x128xf32>
    %10 = tpu.matmul %8, %9, %cst_8 {dimension_numbers = #tpu.dot_dimension_numbers<[1], [0], [0], [1], [0, 0, 1, 1], [], []>} : vector<8x48xbf16>, vector<48x128xbf16>, vector<8x128xf32> -> vector<8x128xf32>
    %c0_9 = arith.constant 0 : index
    %c0_10 = arith.constant 0 : index
    %11 = vector.load %arg5[%c0_9, %c0_10] : memref<1x128xf32, #tpu.memory_space<vmem>>, vector<1x128xf32>
    %12 = vector.broadcast %11 : vector<1x128xf32> to vector<8x128xf32>
    %13 = arith.addf %10, %12 : vector<8x128xf32>
    %cst_11 = arith.constant 0.000000e+00 : f32
    %14 = vector.broadcast %cst_11 : f32 to vector<8x128xf32>
    %15 = arith.maximumf %13, %14 : vector<8x128xf32>
    %16 = arith.truncf %15 : vector<8x128xf32> to vector<8x128xbf16>
    %c0_12 = arith.constant 0 : index
    %c0_13 = arith.constant 0 : index
    %17 = vector.load %arg6[%c0_12, %c0_13] : memref<128x128xbf16, #tpu.memory_space<vmem>>, vector<128x128xbf16>
    %cst_14 = arith.constant dense<0.000000e+00> : vector<8x128xf32>
    %18 = tpu.matmul %16, %17, %cst_14 {dimension_numbers = #tpu.dot_dimension_numbers<[1], [0], [0], [1], [0, 0, 1, 1], [], []>} : vector<8x128xbf16>, vector<128x128xbf16>, vector<8x128xf32> -> vector<8x128xf32>
    %c0_15 = arith.constant 0 : index
    %c0_16 = arith.constant 0 : index
    %19 = vector.load %arg7[%c0_15, %c0_16] : memref<1x128xf32, #tpu.memory_space<vmem>>, vector<1x128xf32>
    %20 = vector.broadcast %19 : vector<1x128xf32> to vector<8x128xf32>
    %21 = arith.addf %18, %20 : vector<8x128xf32>
    %cst_17 = arith.constant 0.000000e+00 : f32
    %22 = vector.broadcast %cst_17 : f32 to vector<8x128xf32>
    %23 = arith.maximumf %21, %22 : vector<8x128xf32>
    %c0_18 = arith.constant 0 : index
    %c0_19 = arith.constant 0 : index
    %24 = vector.load %arg8[%c0_18, %c0_19] : memref<8x128xbf16, #tpu.memory_space<vmem>>, vector<8x128xbf16>
    %25 = arith.truncf %23 : vector<8x128xf32> to vector<8x128xbf16>
    %cst_20 = arith.constant dense<0.000000e+00> : vector<8x8xf32>
    %26 = tpu.matmul %24, %25, %cst_20 {dimension_numbers = #tpu.dot_dimension_numbers<[1], [1], [0], [0], [0, 0, 1, 0], [], []>} : vector<8x128xbf16>, vector<8x128xbf16>, vector<8x8xf32> -> vector<8x8xf32>
    %c0_21 = arith.constant 0 : index
    %c0_22 = arith.constant 0 : index
    %27 = vector.load %arg9[%c0_21, %c0_22] : memref<8x1xf32, #tpu.memory_space<vmem>>, vector<8x1xf32>
    %28 = vector.broadcast %27 : vector<8x1xf32> to vector<8x8xf32>
    %29 = arith.addf %26, %28 : vector<8x8xf32>
    %30 = arith.negf %29 : vector<8x8xf32>
    %31 = math.exp %30 : vector<8x8xf32>
    %cst_23 = arith.constant 1.000000e+00 : f32
    %32 = vector.broadcast %cst_23 : f32 to vector<8x8xf32>
    %33 = arith.addf %32, %31 : vector<8x8xf32>
    %34 = arith.divf %32, %33 : vector<8x8xf32>
    %c0_24 = arith.constant 0 : index
    %c0_25 = arith.constant 0 : index
    %35 = vector.load %arg10[%c0_24, %c0_25] : memref<8x8xf32, #tpu.memory_space<vmem>>, vector<8x8xf32>
    tpu.vector_store %arg10[%c0_24, %c0_25], %34 {strides = array<i32>} : memref<8x8xf32, #tpu.memory_space<vmem>>, vector<8x8xf32>,
    return
  }
  func.func @transform_0(%arg0: i32) -> (i32, i32) {
    %c0_i32 = arith.constant 0 : i32
    %c0_i32_0 = arith.constant 0 : i32
    return %arg0, %c0_i32 : i32, i32
  }
  func.func @transform_1(%arg0: i32) -> (i32, i32) {
    %c0_i32 = arith.constant 0 : i32
    %c0_i32_0 = arith.constant 0 : i32
    %c0_i32_1 = arith.constant 0 : i32
    return %c0_i32, %c0_i32_0 : i32, i32
  }
  func.func @transform_2(%arg0: i32) -> (i32, i32) {
    %c0_i32 = arith.constant 0 : i32
    %c0_i32_0 = arith.constant 0 : i32
    %c0_i32_1 = arith.constant 0 : i32
    return %c0_i32, %c0_i32_0 : i32, i32
  }
  func.func @transform_3(%arg0: i32) -> (i32, i32) {
    %c0_i32 = arith.constant 0 : i32
    %c0_i32_0 = arith.constant 0 : i32
    %c0_i32_1 = arith.constant 0 : i32
    return %c0_i32, %c0_i32_0 : i32, i32
  }
  func.func @transform_4(%arg0: i32) -> (i32, i32) {
    %c0_i32 = arith.constant 0 : i32
    %c0_i32_0 = arith.constant 0 : i32
    %c0_i32_1 = arith.constant 0 : i32
    return %c0_i32, %c0_i32_0 : i32, i32
  }
  func.func @transform_5(%arg0: i32) -> (i32, i32) {
    %c0_i32 = arith.constant 0 : i32
    %c0_i32_0 = arith.constant 0 : i32
    %c0_i32_1 = arith.constant 0 : i32
    return %c0_i32, %c0_i32_0 : i32, i32
  }
  func.func @transform_6(%arg0: i32) -> (i32, i32) {
    %c0_i32 = arith.constant 0 : i32
    %c0_i32_0 = arith.constant 0 : i32
    %c0_i32_1 = arith.constant 0 : i32
    return %c0_i32, %c0_i32_0 : i32, i32
  }
  func.func @transform_7(%arg0: i32) -> (i32, i32) {
    %c0_i32 = arith.constant 0 : i32
    %c0_i32_0 = arith.constant 0 : i32
    %c0_i32_1 = arith.constant 0 : i32
    return %c0_i32, %c0_i32_0 : i32, i32
  }
  func.func @transform_8(%arg0: i32) -> (i32, i32) {
    %c0_i32 = arith.constant 0 : i32
    %c0_i32_0 = arith.constant 0 : i32
    %c0_i32_1 = arith.constant 0 : i32
    return %c0_i32, %c0_i32_0 : i32, i32
  }
  func.func @transform_9(%arg0: i32) -> (i32, i32) {
    %c0_i32 = arith.constant 0 : i32
    %c0_i32_0 = arith.constant 0 : i32
    return %c0_i32, %arg0 : i32, i32
  }
}

</mosaic_0001>

<llo_original>
// kernel: tpu_custom_call.1
$region0: #{tpu_custom_call.1}
  #allocation0 [shape = 'u32[]', space=smem, size = 0x4, offset = 0x4, fixed_abs, tag = 'smem constant byte address 0x4 - core index']
  #allocation1 [shape = 'u32[144,128]{1,0:T(1,128)}', space=vmem, size = 0x12000, scoped, tag = 'internal scratch']
  %s0 = inlined_call_operand.vmem [shape: bf16[8,160], index: 0, kind: input, shape index: {}]
  %s1 = inlined_call_operand.vmem [shape: bf16[160,48], index: 1, kind: input, shape index: {}]
  %s2 = inlined_call_operand.vmem [shape: f32[1,48], index: 2, kind: input, shape index: {}]
  %s3 = inlined_call_operand.vmem [shape: bf16[48,128], index: 3, kind: input, shape index: {}]
  %s4 = inlined_call_operand.vmem [shape: f32[1,128], index: 4, kind: input, shape index: {}]
  %s5 = inlined_call_operand.vmem [shape: bf16[128,128], index: 5, kind: input, shape index: {}]
  %s6 = inlined_call_operand.vmem [shape: f32[1,128], index: 6, kind: input, shape index: {}]
  %s7 = inlined_call_operand.vmem [shape: bf16[8,128], index: 7, kind: input, shape index: {}]
  %s8 = inlined_call_operand.vmem [shape: f32[8,1], index: 8, kind: input, shape index: {}]
  %s9 = inlined_call_operand.hbm [shape: f32[8,8], index: 9, kind: output, shape index: {}]
  %s10 = sld [smem:[#allocation0]]
  $region46: #{tpu_custom_call.1} parent=0
    _
  %s12 = ssub.s32 1, %s10
  %s13 = scalar_select 0, %s12, %s10
  $region1: #{tpu_custom_call.1} parent=0
    #allocation2 [shape = 'u8[4096]{0}', space=vmem, size = 0x1000, scoped, tag = 'output window, operand 0, single buffered']
    #allocation3 [shape = 's32[1]{0}', space=sflag, size = 0x4, scoped, tag = 'scoped memory for tpu_custom_call.1']
    %14 = vsyncpa [#allocation3], 0
    // Predicated region
    $region2: #{tpu_custom_call.1} parent=1 // pred_check
      _
    $region3: #{tpu_custom_call.1} parent=1 // pred_check_branch
      %16 = sbr.rel (0) target = $region5
    $region4: #{tpu_custom_call.1} parent=1 // pred_region
      _
    $region5: #{tpu_custom_call.1} parent=1 // pred_fallthru
      _
    // Predicated region
    $region6: #{tpu_custom_call.1} parent=1 // pred_check
      _
    $region7: #{tpu_custom_call.1} parent=1 // pred_check_branch
      %18 = sbr.rel (0) target = $region9
    $region8: #{tpu_custom_call.1} parent=1 // pred_region
      _
    $region9: #{tpu_custom_call.1} parent=1 // pred_fallthru
      _
    // Predicated region
    $region10: #{tpu_custom_call.1} parent=1 // pred_check
      _
    $region11: #{tpu_custom_call.1} parent=1 // pred_check_branch
      %20 = sbr.rel (0) target = $region13
    $region12: #{tpu_custom_call.1} parent=1 // pred_region
      _
    $region13: #{tpu_custom_call.1} parent=1 // pred_fallthru
      _
    // Predicated region
    $region14: #{tpu_custom_call.1} parent=1 // pred_check
      _
    $region15: #{tpu_custom_call.1} parent=1 // pred_check_branch
      %22 = sbr.rel (0) target = $region17
    $region16: #{tpu_custom_call.1} parent=1 // pred_region
      _
    $region17: #{tpu_custom_call.1} parent=1 // pred_fallthru
      _
    // Predicated region
    $region18: #{tpu_custom_call.1} parent=1 // pred_check
      _
    $region19: #{tpu_custom_call.1} parent=1 // pred_check_branch
      %24 = sbr.rel (0) target = $region21
    $region20: #{tpu_custom_call.1} parent=1 // pred_region
      _
    $region21: #{tpu_custom_call.1} parent=1 // pred_fallthru
      _
    // Predicated region
    $region22: #{tpu_custom_call.1} parent=1 // pred_check
      _
    $region23: #{tpu_custom_call.1} parent=1 // pred_check_branch
      %26 = sbr.rel (0) target = $region25
    $region24: #{tpu_custom_call.1} parent=1 // pred_region
      _
    $region25: #{tpu_custom_call.1} parent=1 // pred_fallthru
      _
    // Predicated region
    $region26: #{tpu_custom_call.1} parent=1 // pred_check
      _
    $region27: #{tpu_custom_call.1} parent=1 // pred_check_branch
      %28 = sbr.rel (0) target = $region29
    $region28: #{tpu_custom_call.1} parent=1 // pred_region
      _
    $region29: #{tpu_custom_call.1} parent=1 // pred_fallthru
      _
    // Predicated region
    $region30: #{tpu_custom_call.1} parent=1 // pred_check
      _
    $region31: #{tpu_custom_call.1} parent=1 // pred_check_branch
      %30 = sbr.rel (0) target = $region33
    $region32: #{tpu_custom_call.1} parent=1 // pred_region
      _
    $region33: #{tpu_custom_call.1} parent=1 // pred_fallthru
      _
    // Predicated region
    $region34: #{tpu_custom_call.1} parent=1 // pred_check
      _
    $region35: #{tpu_custom_call.1} parent=1 // pred_check_branch
      %32 = sbr.rel (0) target = $region37
    $region36: #{tpu_custom_call.1} parent=1 // pred_region
      _
    $region37: #{tpu_custom_call.1} parent=1 // pred_fallthru
      _
    %v34 = vld [vmem:[%s0] sm:$0xff]
    %v35 = vld [vmem:[%s1] sm:$0xf]
    %v36 = vld [vmem:[%s1 + $0x4] sm:$0xf]
    %v37 = vld [vmem:[%s1 + $0x8] sm:$0xf]
    %v38 = vld [vmem:[%s1 + $0xc] sm:$0xf]
    %v39 = vld [vmem:[%s1 + $0x10] sm:$0xf]
    %v40 = vld [vmem:[%s1 + $0x14] sm:$0xf]
    %v41 = vld [vmem:[%s1 + $0x18] sm:$0xf]
    %v42 = vld [vmem:[%s1 + $0x1c] sm:$0xf]
    %v43 = vld [vmem:[%s1 + $0x20] sm:$0xf]
    %v44 = vld [vmem:[%s1 + $0x24] sm:$0xf]
    %v45 = vld [vmem:[%s1 + $0x28] sm:$0xf]
    %v46 = vld [vmem:[%s1 + $0x2c] sm:$0xf]
    %v47 = vld [vmem:[%s1 + $0x30] sm:$0xf]
    %v48 = vld [vmem:[%s1 + $0x34] sm:$0xf]
    %v49 = vld [vmem:[%s1 + $0x38] sm:$0xf]
    %v50 = vld [vmem:[%s1 + $0x3c] sm:$0xf]
    %v51 = vld [vmem:[%s1 + $0x40] sm:$0xf]
    %v52 = vld [vmem:[%s1 + $0x44] sm:$0xf]
    %v53 = vld [vmem:[%s1 + $0x48] sm:$0xf]
    %v54 = vld [vmem:[%s1 + $0x4c] sm:$0xf]
    %v55 = vld [vmem:[%s2] sm:$0x1]
    %v57 = vlaneseq
    %v58 = vshrl.u32 %v57, 7
    %v59 = vsub.s32 0, %v58
    %v60 = vrot.slane %v55, %v59
    %v63 = vunpack.c.l.b16 %v34
    %v64 = vunpack.c.h.b16 %v34
    %v65 = vpack.c.b16 %v63, %v63
    %v66 = vpack.c.b16 %v64, %v64
    %v88 = vunpack.c.l.b16 %v35
    %v89 = vunpack.c.l.b16 %v36
    %v90 = vunpack.c.l.b16 %v37
    %v91 = vunpack.c.l.b16 %v38
    %v92 = vunpack.c.l.b16 %v39
    %v93 = vunpack.c.l.b16 %v40
    %v94 = vunpack.c.l.b16 %v41
    %v95 = vunpack.c.l.b16 %v42
    %v96 = vunpack.c.l.b16 %v43
    %v97 = vunpack.c.l.b16 %v44
    %v98 = vunpack.c.l.b16 %v45
    %v99 = vunpack.c.l.b16 %v46
    %v100 = vunpack.c.l.b16 %v47
    %v101 = vunpack.c.l.b16 %v48
    %v102 = vunpack.c.l.b16 %v49
    %v103 = vunpack.c.l.b16 %v50
    %v104 = vunpack.c.l.b16 %v51
    %v105 = vunpack.c.l.b16 %v52
    %v106 = vunpack.c.l.b16 %v53
    %v107 = vunpack.c.l.b16 %v54
    %v108 = vpack.c.b16 %v89, %v88
    %v109 = vpack.c.b16 %v91, %v90
    %v110 = vpack.c.b16 %v93, %v92
    %v111 = vpack.c.b16 %v95, %v94
    %v112 = vpack.c.b16 %v97, %v96
    %v113 = vpack.c.b16 %v99, %v98
    %v114 = vpack.c.b16 %v101, %v100
    %v115 = vpack.c.b16 %v103, %v102
    %v116 = vpack.c.b16 %v105, %v104
    %v117 = vpack.c.b16 %v107, %v106
    %vm128 = vcmask 261120
    %v130 = vsel %vm128, %v66, 0
    %132 = vmatprep.subr.bf16.mxu0 0
    %133 = vmatpush1.bf16.msra.mxu0 %v108
    %134 = vmatprep.subr.bf16.mxu0 0
    %135 = vmatpush1.bf16.msra.mxu0 %v109
    %136 = vmatprep.subr.bf16.mxu0 0
    %137 = vmatpush1.bf16.msra.mxu0 %v110
    %138 = vmatprep.subr.bf16.mxu0 0
    %139 = vmatpush1.bf16.msra.mxu0 %v111
    %140 = vmatprep.subr.bf16.mxu0 0
    %141 = vmatpush1.bf16.msra.mxu0 %v112
    %142 = vmatprep.subr.bf16.mxu0 0
    %143 = vmatpush1.bf16.msra.mxu0 %v113
    %144 = vmatprep.subr.bf16.mxu0 0
    %145 = vmatpush1.bf16.msra.mxu0 %v114
    %146 = vmatprep.subr.bf16.mxu0 0
    %147 = vmatpush1.bf16.msra.mxu0 %v115
    %148 = vmatprep.subr.bf16.mxu0 0
    %149 = vmatpush1.bf16.msra.mxu0 %v116
    %150 = vmatprep.subr.bf16.mxu0 0
    %151 = vmatpush1.bf16.msra.mxu0 %v117
    %152 = vmatprep.subr.bf16.mxu0 0
    %153 = vmatpush1.bf16.msra.mxu0 0
    %154 = vmatprep.subr.bf16.mxu0 0
    %155 = vmatpush1.bf16.msra.mxu0 0
    %156 = vmatprep.subr.bf16.mxu0 0
    %157 = vmatpush1.bf16.msra.mxu0 0
    %158 = vmatprep.subr.bf16.mxu0 0
    %159 = vmatpush1.bf16.msra.mxu0 0
    %160 = vmatprep.subr.bf16.mxu0 0
    %161 = vmatpush1.bf16.msra.mxu0 0
    %162 = vmatprep.subr.bf16.mxu0 0
    %163 = vmatpush1.bf16.msra.mxu0 0
    %164 = vmatprep.mubr.bf16.mxu0 %v130
    %165 = vmatmul.mubr.bf16.gmra.mrb[0].mxu0 %v65
    %v166 = vpop.f32.mrb[0].mxu0
    %v167 = vadd.f32 %v60, %v166
    %v168 = vpop.f32.mrb[0].mxu0
    %v169 = vpop.f32.mrb[0].mxu0
    %v170 = vpop.f32.mrb[0].mxu0
    %171 = vdwg.mxu0
    %v172 = vmax.f32 %v167, 0.0
    %v173 = vpack.c.bf16 %v172, %v172
    %v174 = vld [vmem:[%s3] sm:$0xf]
    %v175 = vld [vmem:[%s3 + $0x4] sm:$0xf]
    %v176 = vld [vmem:[%s3 + $0x8] sm:$0xf]
    %v177 = vld [vmem:[%s3 + $0xc] sm:$0xf]
    %v178 = vld [vmem:[%s3 + $0x10] sm:$0xf]
    %v179 = vld [vmem:[%s3 + $0x14] sm:$0xf]
    %v180 = vld [vmem:[%s4] sm:$0x1]
    %v182 = vlaneseq
    %v183 = vshrl.u32 %v182, 7
    %v184 = vsub.s32 0, %v183
    %v185 = vrot.slane %v180, %v184
    %v193 = vunpack.c.l.b16 %v174
    %v194 = vunpack.c.l.b16 %v175
    %v195 = vunpack.c.l.b16 %v176
    %v196 = vunpack.c.l.b16 %v177
    %v197 = vunpack.c.l.b16 %v178
    %v198 = vunpack.c.l.b16 %v179
    %v199 = vpack.c.b16 %v194, %v193
    %v200 = vpack.c.b16 %v196, %v195
    %v201 = vpack.c.b16 %v198, %v197
    %vm205 = vcmask 392192
    %v207 = vsel %vm205, %v173, 0
    %209 = vmatprep.subr.bf16.mxu0 0
    %210 = vmatpush1.bf16.msra.mxu0 %v199
    %211 = vmatprep.subr.bf16.mxu0 0
    %212 = vmatpush1.bf16.msra.mxu0 %v200
    %213 = vmatprep.subr.bf16.mxu0 0
    %214 = vmatpush1.bf16.msra.mxu0 %v201
    %215 = vmatprep.subr.bf16.mxu0 0
    %216 = vmatpush1.bf16.msra.mxu0 0
    %217 = vmatprep.subr.bf16.mxu0 0
    %218 = vmatpush1.bf16.msra.mxu0 0
    %219 = vmatprep.subr.bf16.mxu0 0
    %220 = vmatpush1.bf16.msra.mxu0 0
    %221 = vmatprep.subr.bf16.mxu0 0
    %222 = vmatpush1.bf16.msra.mxu0 0
    %223 = vmatprep.subr.bf16.mxu0 0
    %224 = vmatpush1.bf16.msra.mxu0 0
    %225 = vmatprep.subr.bf16.mxu0 0
    %226 = vmatpush1.bf16.msra.mxu0 0
    %227 = vmatprep.subr.bf16.mxu0 0
    %228 = vmatpush1.bf16.msra.mxu0 0
    %229 = vmatprep.subr.bf16.mxu0 0
    %230 = vmatpush1.bf16.msra.mxu0 0
    %231 = vmatprep.subr.bf16.mxu0 0
    %232 = vmatpush1.bf16.msra.mxu0 0
    %233 = vmatprep.subr.bf16.mxu0 0
    %234 = vmatpush1.bf16.msra.mxu0 0
    %235 = vmatprep.subr.bf16.mxu0 0
    %236 = vmatpush1.bf16.msra.mxu0 0
    %237 = vmatprep.subr.bf16.mxu0 0
    %238 = vmatpush1.bf16.msra.mxu0 0
    %239 = vmatprep.subr.bf16.mxu0 0
    %240 = vmatpush1.bf16.msra.mxu0 0
    %241 = vmatprep.mubr.bf16.mxu0 0
    %242 = vmatmul.mubr.bf16.gmra.mrb[0].mxu0 %v207
    %v243 = vpop.f32.mrb[0].mxu0
    %v244 = vadd.f32 %v185, %v243
    %v245 = vpop.f32.mrb[0].mxu0
    %v246 = vpop.f32.mrb[0].mxu0
    %v247 = vpop.f32.mrb[0].mxu0
    %248 = vdwg.mxu0
    %v249 = vmax.f32 %v244, 0.0
    %v250 = vpack.c.bf16 %v249, %v249
    %v251 = vld [vmem:[%s5] sm:$0xf]
    %v252 = vld [vmem:[%s5 + $0x4] sm:$0xf]
    %v253 = vld [vmem:[%s5 + $0x8] sm:$0xf]
    %v254 = vld [vmem:[%s5 + $0xc] sm:$0xf]
    %v255 = vld [vmem:[%s5 + $0x10] sm:$0xf]
    %v256 = vld [vmem:[%s5 + $0x14] sm:$0xf]
    %v257 = vld [vmem:[%s5 + $0x18] sm:$0xf]
    %v258 = vld [vmem:[%s5 + $0x1c] sm:$0xf]
    %v259 = vld [vmem:[%s5 + $0x20] sm:$0xf]
    %v260 = vld [vmem:[%s5 + $0x24] sm:$0xf]
    %v261 = vld [vmem:[%s5 + $0x28] sm:$0xf]
    %v262 = vld [vmem:[%s5 + $0x2c] sm:$0xf]
    %v263 = vld [vmem:[%s5 + $0x30] sm:$0xf]
    %v264 = vld [vmem:[%s5 + $0x34] sm:$0xf]
    %v265 = vld [vmem:[%s5 + $0x38] sm:$0xf]
    %v266 = vld [vmem:[%s5 + $0x3c] sm:$0xf]
    %v267 = vld [vmem:[%s6] sm:$0x1]
    %v269 = vlaneseq
    %v270 = vshrl.u32 %v269, 7
    %v271 = vsub.s32 0, %v270
    %v272 = vrot.slane %v267, %v271
    %v290 = vunpack.c.l.b16 %v251
    %v291 = vunpack.c.l.b16 %v252
    %v292 = vunpack.c.l.b16 %v253
    %v293 = vunpack.c.l.b16 %v254
    %v294 = vunpack.c.l.b16 %v255
    %v295 = vunpack.c.l.b16 %v256
    %v296 = vunpack.c.l.b16 %v257
    %v297 = vunpack.c.l.b16 %v258
    %v298 = vunpack.c.l.b16 %v259
    %v299 = vunpack.c.l.b16 %v260
    %v300 = vunpack.c.l.b16 %v261
    %v301 = vunpack.c.l.b16 %v262
    %v302 = vunpack.c.l.b16 %v263
    %v303 = vunpack.c.l.b16 %v264
    %v304 = vunpack.c.l.b16 %v265
    %v305 = vunpack.c.l.b16 %v266
    %v306 = vpack.c.b16 %v291, %v290
    %v307 = vpack.c.b16 %v293, %v292
    %v308 = vpack.c.b16 %v295, %v294
    %v309 = vpack.c.b16 %v297, %v296
    %v310 = vpack.c.b16 %v299, %v298
    %v311 = vpack.c.b16 %v301, %v300
    %v312 = vpack.c.b16 %v303, %v302
    %v313 = vpack.c.b16 %v305, %v304
    %322 = vmatprep.subr.bf16.mxu0 0
    %323 = vmatpush1.bf16.msra.mxu0 %v306
    %324 = vmatprep.subr.bf16.mxu0 0
    %325 = vmatpush1.bf16.msra.mxu0 %v307
    %326 = vmatprep.subr.bf16.mxu0 0
    %327 = vmatpush1.bf16.msra.mxu0 %v308
    %328 = vmatprep.subr.bf16.mxu0 0
    %329 = vmatpush1.bf16.msra.mxu0 %v309
    %330 = vmatprep.subr.bf16.mxu0 0
    %331 = vmatpush1.bf16.msra.mxu0 %v310
    %332 = vmatprep.subr.bf16.mxu0 0
    %333 = vmatpush1.bf16.msra.mxu0 %v311
    %334 = vmatprep.subr.bf16.mxu0 0
    %335 = vmatpush1.bf16.msra.mxu0 %v312
    %336 = vmatprep.subr.bf16.mxu0 0
    %337 = vmatpush1.bf16.msra.mxu0 %v313
    %338 = vmatprep.subr.bf16.mxu0 0
    %339 = vmatpush1.bf16.msra.mxu0 0
    %340 = vmatprep.subr.bf16.mxu0 0
    %341 = vmatpush1.bf16.msra.mxu0 0
    %342 = vmatprep.subr.bf16.mxu0 0
    %343 = vmatpush1.bf16.msra.mxu0 0
    %344 = vmatprep.subr.bf16.mxu0 0
    %345 = vmatpush1.bf16.msra.mxu0 0
    %346 = vmatprep.subr.bf16.mxu0 0
    %347 = vmatpush1.bf16.msra.mxu0 0
    %348 = vmatprep.subr.bf16.mxu0 0
    %349 = vmatpush1.bf16.msra.mxu0 0
    %350 = vmatprep.subr.bf16.mxu0 0
    %351 = vmatpush1.bf16.msra.mxu0 0
    %352 = vmatprep.subr.bf16.mxu0 0
    %353 = vmatpush1.bf16.msra.mxu0 0
    %354 = vmatprep.mubr.bf16.mxu0 0
    %355 = vmatmul.mubr.bf16.gmra.mrb[0].mxu0 %v250
    %v356 = vpop.f32.mrb[0].mxu0
    %v357 = vadd.f32 %v272, %v356
    %v358 = vpop.f32.mrb[0].mxu0
    %v359 = vpop.f32.mrb[0].mxu0
    %v360 = vpop.f32.mrb[0].mxu0
    %361 = vdwg.mxu0
    %v362 = vmax.f32 %v357, 0.0
    %v363 = vld [vmem:[%s7] sm:$0xf]
    %v364 = vpack.c.bf16 %v362, %v362
    %v365 = vld [vmem:[%s8] sm:$0xff]
    %367 = vset.pattern.permute.xlu0 0
    %368 = vperm.xlu0 %367, %v365
    %v369 = vpop.permute.xlu0 %368
    %371 = vmatprep.subr.bf16.mxu0 0
    %372 = vmatpush1.bf16.xpose.msra.mxu0 %v364
    %373 = vmatprep.subr.bf16.mxu0 0
    %374 = vmatpush1.bf16.xpose.msra.mxu0 0
    %375 = vmatprep.subr.bf16.mxu0 0
    %376 = vmatpush1.bf16.xpose.msra.mxu0 0
    %377 = vmatprep.subr.bf16.mxu0 0
    %378 = vmatpush1.bf16.xpose.msra.mxu0 0
    %379 = vmatprep.subr.bf16.mxu0 0
    %380 = vmatpush1.bf16.xpose.msra.mxu0 0
    %381 = vmatprep.subr.bf16.mxu0 0
    %382 = vmatpush1.bf16.xpose.msra.mxu0 0
    %383 = vmatprep.subr.bf16.mxu0 0
    %384 = vmatpush1.bf16.xpose.msra.mxu0 0
    %385 = vmatprep.subr.bf16.mxu0 0
    %386 = vmatpush1.bf16.xpose.msra.mxu0 0
    %387 = vmatprep.subr.bf16.mxu0 0
    %388 = vmatpush1.bf16.xpose.msra.mxu0 0
    %389 = vmatprep.subr.bf16.mxu0 0
    %390 = vmatpush1.bf16.xpose.msra.mxu0 0
    %391 = vmatprep.subr.bf16.mxu0 0
    %392 = vmatpush1.bf16.xpose.msra.mxu0 0
    %393 = vmatprep.subr.bf16.mxu0 0
    %394 = vmatpush1.bf16.xpose.msra.mxu0 0
    %395 = vmatprep.subr.bf16.mxu0 0
    %396 = vmatpush1.bf16.xpose.msra.mxu0 0
    %397 = vmatprep.subr.bf16.mxu0 0
    %398 = vmatpush1.bf16.xpose.msra.mxu0 0
    %399 = vmatprep.subr.bf16.mxu0 0
    %400 = vmatpush1.bf16.xpose.msra.mxu0 0
    %401 = vmatprep.subr.bf16.mxu0 0
    %402 = vmatpush1.bf16.xpose.msra.mxu0 0
    %403 = vmatprep.mubr.bf16.mxu0 0
    %404 = vmatmul.mubr.bf16.gmra.mrb[0].mxu0 %v363
    %v405 = vpop.f32.mrb[0].mxu0
    %v406 = vadd.f32 %v369, %v405
    %v407 = vpop.f32.mrb[0].mxu0
    %v408 = vpop.f32.mrb[0].mxu0
    %v409 = vpop.f32.mrb[0].mxu0
    %410 = vdwg.mxu0
    %v411 = vxor.u32 %v406, 2147483648
    %v412 = vmul.f32 %v411, 1.442695
    %v413 = vpow.pop %v412
    %v414 = vadd.f32 %v413, 1.0
    %v415 = vrcp.pop %v414
    %v416 = vmul.f32 1.0, %v415
    %vm417 = vcmask 64512
    %418 = vst.msk [vmem:[#allocation2] sm:$0xff] %vm417, %v416
    // Predicated region
    $region38: #{tpu_custom_call.1} parent=1 // pred_check
      _
    $region39: #{tpu_custom_call.1} parent=1 // pred_check_branch
      %420 = sbr.rel (0) target = $region41
    $region40: #{tpu_custom_call.1} parent=1 // pred_region
      %s422 = ssub.s32 128, 128
      %423 = vsyncadd [#allocation3], %s422
      %s425 = sshll.u32 [#allocation2], 4
      %s426 = int_to_ptr.vmem [resolvable:$true] %s425
      %428 = dma.vmem_to_hbm [thread:$0]  %s426, 128, %s9, [#allocation3]
    $region41: #{tpu_custom_call.1} parent=1 // pred_fallthru
      _
    // Predicated region
    $region42: #{tpu_custom_call.1} parent=1 // pred_check
      _
    $region43: #{tpu_custom_call.1} parent=1 // pred_check_branch
      %430 = sbr.rel (0) target = $region45
    $region44: #{tpu_custom_call.1} parent=1 // pred_region
      %431 = dma.done [#allocation3], 128
    $region45: #{tpu_custom_call.1} parent=1 // pred_fallthru
      _
    %432 = vsyncpa [#allocation3], 1

</llo_original>
